<compile_context>
chip_gen: v6e
topology: v6e:2x2x1
jax: 0.10.0
libtpu: 0.0.40
codegen_flags: <defaults>
</compile_context>

<pallas_src>
import functools

import numpy as np

import jax
import jax.numpy as jnp
from jax import lax
from jax.experimental import pallas as pl
from jax.experimental.pallas import tpu as pltpu

LANES = 128
SUBLANES = 8
# 4096 rows x 128 lanes x 4 B = 2 MiB per f32 input block; 'mean' needs
# 2 inputs x 2 pipeline buffers = 8 MiB, 'none' ~12 MiB -> fits every chip's
# scoped-VMEM default.
# TODO(synk): on v7x (3.2 TB/s HBM) 8192-row blocks would amortize the fixed
# per-step overhead further; kept 4096 so v5e's 16 MiB default also holds.
MAX_TILE_ROWS = 4096


def _mape_mean_kernel(pred_ref, true_ref, out_ref, acc_ref, *,
                      epsilon, total, tile_rows, tiles_per_core, acc_rows,
                      has_tail):
    """Accumulate sum(|p-t| / max(|t|, eps)) into an (acc_rows,128) partial."""
    p = pl.program_id(0)   # partial-sum / TensorCore index ("parallel")
    k = pl.program_id(1)   # reduction step within this partial ("arbitrary")

    @pl.when(k == 0)
    def _():
        acc_ref[...] = jnp.zeros_like(acc_ref)

    yp = pred_ref[...].astype(jnp.float32)
    yt = true_ref[...].astype(jnp.float32)
    ape = jnp.abs(yp - yt) / jnp.maximum(jnp.abs(yt), jnp.float32(epsilon))

    def accumulate(contrib):
        if tile_rows == acc_rows:
            acc_ref[...] += contrib
        else:
            # Fold (tile_rows,128) -> (8,128) with pure VPU vreg adds; the
            # reshape splits the sublane dim on a vreg boundary (no relayout).
            acc_ref[...] += contrib.reshape(-1, acc_rows, LANES).sum(axis=0)

    if has_tail:
        block_elems = tile_rows * LANES
        # Logical (unclamped) element offset of this block; used both to skip
        # the mask on interior blocks and to zero phantom / overhang elements.
        start = (p * tiles_per_core + k) * block_elems

        @pl.when(start + block_elems <= total)
        def _():  # fully in-bounds block: no mask work at all
            accumulate(ape)

        @pl.when(start + block_elems > total)
        def _():  # ragged tail or phantom block: element-granular mask
            row = lax.broadcasted_iota(jnp.int32, ape.shape, 0)
            lane = lax.broadcasted_iota(jnp.int32, ape.shape, 1)
            idx = start + row * LANES + lane
            # Keep this a select (jnp.where), NOT `ape * mask`: ape is
            # computed on unspecified data (possibly NaN/Inf) past the end.
            accumulate(jnp.where(idx < total, ape, 0.0))
    else:
        accumulate(ape)

    @pl.when(k == pl.num_programs(1) - 1)
    def _():
        out_ref[0] = acc_ref[...]


def _mape_none_kernel(pred_ref, true_ref, out_ref, *, epsilon):
    yp = pred_ref[...].astype(jnp.float32)
    yt = true_ref[...].astype(jnp.float32)
    ape = jnp.abs(yp - yt) / jnp.maximum(jnp.abs(yt), jnp.float32(epsilon))
    out_ref[...] = ape.astype(out_ref.dtype)


@functools.partial(jax.jit, static_argnames=("reduction", "epsilon"))
def mape_loss(y_pred, y_true, reduction: str = "mean", epsilon: float = 0.001):
    """JAX/Pallas equivalent of MAPELoss.forward."""
    assert y_pred.shape == y_true.shape
    orig_shape = y_pred.shape
    total = y_pred.size  # static Python int

    out_dtype = jnp.result_type(y_pred, y_true)
    if not jnp.issubdtype(out_dtype, jnp.floating):
        out_dtype = np.dtype(np.float32)
    out_dtype = np.dtype(out_dtype)

    pred_f = y_pred.reshape(-1)
    true_f = y_true.reshape(-1)

    # Only pad to the next multiple of 128 lanes (<=127 zeros) when numel is
    # not lane-aligned; everything else (ragged rows / blocks) is masked
    # in-kernel, so the common case is a zero-copy reshape — no extra HBM pass.
    if total % LANES:
        pad = LANES - (total % LANES)
        pred_f = jnp.pad(pred_f, (0, pad))
        true_f = jnp.pad(true_f, (0, pad))
    rows = pred_f.size // LANES
    pred2 = pred_f.reshape(rows, LANES)
    true2 = true_f.reshape(rows, LANES)

    if rows >= SUBLANES:
        tile_rows = min(MAX_TILE_ROWS, (rows // SUBLANES) * SUBLANES)
    else:
        tile_rows = rows  # tiny input: single full-extent block
    num_tiles = (rows + tile_rows - 1) // tile_rows

    in_bytes_per_el = pred2.dtype.itemsize + true2.dtype.itemsize

    if reduction == "mean":
        num_partials = 2 if num_tiles >= 2 else 1   # v7x: one per TensorCore
        tiles_per_core = (num_tiles + num_partials - 1) // num_partials
        acc_rows = SUBLANES if tile_rows % SUBLANES == 0 else tile_rows
        # True if any block overhangs `total` (ragged tail, lane padding, or a
        # phantom block when num_partials doesn't divide num_tiles).
        has_tail = (num_partials * tiles_per_core * tile_rows * LANES) != total

        last_tile = num_tiles - 1
        in_spec = pl.BlockSpec(
            (tile_rows, LANES),
            # Clamp phantom block indices into range; their contribution is
            # zeroed in-kernel via the logical element mask.
            lambda p_, k_: (jnp.minimum(p_ * tiles_per_core + k_, last_tile), 0))

        kernel = functools.partial(
            _mape_mean_kernel,
            epsilon=float(epsilon), total=total, tile_rows=tile_rows,
            tiles_per_core=tiles_per_core, acc_rows=acc_rows, has_tail=has_tail)

        partials = pl.pallas_call(
            kernel,
            out_shape=jax.ShapeDtypeStruct((num_partials, acc_rows, LANES),
                                           jnp.float32),
            grid_spec=pltpu.PrefetchScalarGridSpec(
                num_scalar_prefetch=0,
                grid=(num_partials, tiles_per_core),
                in_specs=[in_spec, in_spec],
                out_specs=pl.BlockSpec((1, acc_rows, LANES),
                                       lambda p_, k_: (p_, 0, 0)),
                scratch_shapes=[pltpu.VMEM((acc_rows, LANES), jnp.float32)],
            ),
            compiler_params=pltpu.CompilerParams(
                dimension_semantics=("parallel", "arbitrary"),
                vmem_limit_bytes=32 * 1024 * 1024,
            ),
            cost_estimate=pl.CostEstimate(
                flops=5 * total,
                transcendentals=0,
                bytes_accessed=total * in_bytes_per_el
                + num_partials * acc_rows * LANES * 4),
        )(pred2, true2)
        # Tiny (<=2 KiB) final reduction + 1/numel scale in the wrapper.
        return (jnp.sum(partials) / total).astype(out_dtype)

    elif reduction == "none":
        tile_spec = pl.BlockSpec((tile_rows, LANES), lambda i: (i, 0))
        out2 = pl.pallas_call(
            functools.partial(_mape_none_kernel, epsilon=float(epsilon)),
            out_shape=jax.ShapeDtypeStruct((rows, LANES), out_dtype),
            grid_spec=pltpu.PrefetchScalarGridSpec(
                num_scalar_prefetch=0,
                grid=(num_tiles,),
                in_specs=[tile_spec, tile_spec],
                out_specs=pl.BlockSpec((tile_rows, LANES), lambda i: (i, 0)),
            ),
            compiler_params=pltpu.CompilerParams(
                dimension_semantics=("parallel",),  # purely elementwise
                vmem_limit_bytes=32 * 1024 * 1024,
            ),
            cost_estimate=pl.CostEstimate(
                flops=5 * total,
                transcendentals=0,
                bytes_accessed=total * (in_bytes_per_el + out_dtype.itemsize)),
        )(pred2, true2)
        return out2.reshape(-1)[:total].reshape(orig_shape)

    else:
        raise NotImplementedError(f"unknown reduction: {reduction}")


def _ref_mape(yp, yt, reduction="mean", eps=0.001):
    ape = jnp.abs(yp - yt) / jnp.maximum(jnp.abs(yt), eps)
    if reduction == "none":
        return ape
    return jnp.sum(ape) / yp.size


if __name__ == "__main__":
    key = jax.random.PRNGKey(0)
    k1, k2, k3, k4, k5, k6 = jax.random.split(key, 6)

    # Primary small NCHW case: batch=2, channels=4, spatial=16x16.
    shape = (2, 4, 16, 16)
    y_pred = jax.random.normal(k1, shape, dtype=jnp.float32)
    y_true = jax.random.normal(k2, shape, dtype=jnp.float32)

    loss = jax.block_until_ready(mape_loss(y_pred, y_true))
    ref = _ref_mape(y_pred, y_true)
    assert jnp.allclose(loss, ref, rtol=1e-5, atol=1e-6), (loss, ref)

    ew = jax.block_until_ready(mape_loss(y_pred, y_true, reduction="none"))
    assert ew.shape == shape and ew.dtype == y_pred.dtype
    assert jnp.allclose(ew, _ref_mape(y_pred, y_true, "none"),
                        rtol=1e-5, atol=1e-6)

    # Multi-block grid with a ragged tail block plus a phantom block on the
    # second partial sum: 8320 rows -> 3 blocks of 4096 rows, split as (2, 2).
    shape2 = (8, 8, 128, 130)
    y_pred2 = jax.random.normal(k3, shape2, dtype=jnp.float32)
    y_true2 = jax.random.normal(k4, shape2, dtype=jnp.float32)
    loss2 = jax.block_until_ready(mape_loss(y_pred2, y_true2))
    ref2 = _ref_mape(y_pred2, y_true2)
    assert jnp.allclose(loss2, ref2, rtol=1e-4, atol=1e-6), (loss2, ref2)

    # Element count not a multiple of 128: exercises the lane-pad fallback and
    # the element-granular tail mask.
    shape3 = (3, 5, 7)
    y_pred3 = jax.random.normal(k5, shape3, dtype=jnp.float32)
    y_true3 = jax.random.normal(k6, shape3, dtype=jnp.float32)
    loss3 = jax.block_until_ready(mape_loss(y_pred3, y_true3))
    ref3 = _ref_mape(y_pred3, y_true3)
    assert jnp.allclose(loss3, ref3, rtol=1e-5, atol=1e-6), (loss3, ref3)
    ew3 = jax.block_until_ready(mape_loss(y_pred3, y_true3, reduction="none"))
    assert ew3.shape == shape3
    assert jnp.allclose(ew3, _ref_mape(y_pred3, y_true3, "none"),
                        rtol=1e-5, atol=1e-6)

    print("KERNEL_OK")
</pallas_src>

<mosaic_0001>
module attributes {stable_mosaic.version = 11 : i64} {
  func.func @_mape_mean_kernel(%arg0: i32, %arg1: i32, %arg2: memref<16x128xf32, #tpu.memory_space<vmem>>, %arg3: memref<16x128xf32, #tpu.memory_space<vmem>>, %arg4: memref<1x8x128xf32, #tpu.memory_space<vmem>>, %arg5: memref<8x128xf32, #tpu.memory_space<vmem>>) attributes {dimension_semantics = [#tpu.dimension_semantics<parallel>, #tpu.dimension_semantics<arbitrary>], iteration_bounds = array<i64: 1, 1>, scalar_prefetch = 0 : i64, scratch_operands = 1 : i64, tpu.core_type = #tpu.core_type<tc>, window_params = [{transform_indices = @transform_0, window_bounds = array<i64: 16, 128>}, {transform_indices = @transform_1, window_bounds = array<i64: 16, 128>}, {transform_indices = @transform_2, window_bounds = array<i64: 1, 8, 128>}]} {
    %c0_i32 = arith.constant 0 : i32
    %0 = arith.cmpi eq, %arg1, %c0_i32 : i32
    %1 = arith.extui %0 : i1 to i32
    %c0_i32_0 = arith.constant 0 : i32
    %2 = arith.cmpi ne, %1, %c0_i32_0 : i32
    scf.if %2 {
      %cst_11 = arith.constant 0.000000e+00 : f32
      %19 = vector.broadcast %cst_11 : f32 to vector<8x128xf32>
      %c0_12 = arith.constant 0 : index
      %c0_13 = arith.constant 0 : index
      %20 = vector.load %arg5[%c0_12, %c0_13] : memref<8x128xf32, #tpu.memory_space<vmem>>, vector<8x128xf32>
      tpu.vector_store %arg5[%c0_12, %c0_13], %19 {strides = array<i32>} : memref<8x128xf32, #tpu.memory_space<vmem>>, vector<8x128xf32>,
    } else {
    }
    %c0 = arith.constant 0 : index
    %c0_1 = arith.constant 0 : index
    %3 = vector.load %arg2[%c0, %c0_1] : memref<16x128xf32, #tpu.memory_space<vmem>>, vector<16x128xf32>
    %c0_2 = arith.constant 0 : index
    %c0_3 = arith.constant 0 : index
    %4 = vector.load %arg3[%c0_2, %c0_3] : memref<16x128xf32, #tpu.memory_space<vmem>>, vector<16x128xf32>
    %5 = arith.subf %3, %4 : vector<16x128xf32>
    %6 = math.absf %5 : vector<16x128xf32>
    %7 = math.absf %4 : vector<16x128xf32>
    %cst = arith.constant 1.000000e-03 : f32
    %8 = vector.broadcast %cst : f32 to vector<16x128xf32>
    %9 = arith.maximumf %7, %8 : vector<16x128xf32>
    %10 = arith.divf %6, %9 : vector<16x128xf32>
    %c0_4 = arith.constant 0 : index
    %c0_5 = arith.constant 0 : index
    %11 = vector.load %arg5[%c0_4, %c0_5] : memref<8x128xf32, #tpu.memory_space<vmem>>, vector<8x128xf32>
    %12 = vector.shape_cast %10 : vector<16x128xf32> to vector<2x8x128xf32>
    %cst_6 = arith.constant dense<0.000000e+00> : vector<8x128xf32>
    %13 = vector.multi_reduction <add>, %12, %cst_6 [0] : vector<2x8x128xf32> to vector<8x128xf32>
    %14 = arith.addf %11, %13 : vector<8x128xf32>
    %c0_7 = arith.constant 0 : index
    %c0_8 = arith.constant 0 : index
    %15 = vector.load %arg5[%c0_7, %c0_8] : memref<8x128xf32, #tpu.memory_space<vmem>>, vector<8x128xf32>
    tpu.vector_store %arg5[%c0_7, %c0_8], %14 {strides = array<i32>} : memref<8x128xf32, #tpu.memory_space<vmem>>, vector<8x128xf32>,
    %c0_i32_9 = arith.constant 0 : i32
    %16 = arith.cmpi eq, %arg1, %c0_i32_9 : i32
    %17 = arith.extui %16 : i1 to i32
    %c0_i32_10 = arith.constant 0 : i32
    %18 = arith.cmpi ne, %17, %c0_i32_10 : i32
    scf.if %18 {
      %c0_11 = arith.constant 0 : index
      %c0_12 = arith.constant 0 : index
      %19 = vector.load %arg5[%c0_11, %c0_12] : memref<8x128xf32, #tpu.memory_space<vmem>>, vector<8x128xf32>
      %c0_13 = arith.constant 0 : index
      %c0_14 = arith.constant 0 : index
      %c0_15 = arith.constant 0 : index
      %20 = vector.load %arg4[%c0_13, %c0_14, %c0_15] : memref<1x8x128xf32, #tpu.memory_space<vmem>>, vector<1x8x128xf32>
      %21 = vector.shape_cast %20 : vector<1x8x128xf32> to vector<8x128xf32>
      %22 = vector.shape_cast %19 : vector<8x128xf32> to vector<1x8x128xf32>
      tpu.vector_store %arg4[%c0_13, %c0_14, %c0_15], %22 {strides = array<i32>} : memref<1x8x128xf32, #tpu.memory_space<vmem>>, vector<1x8x128xf32>,
    } else {
    }
    return
  }
  func.func @transform_0(%arg0: i32, %arg1: i32) -> (i32, i32) {
    %c1_i32 = arith.constant 1 : i32
    %0 = arith.muli %arg0, %c1_i32 : i32
    %1 = arith.addi %0, %arg1 : i32
    %c0_i32 = arith.constant 0 : i32
    %2 = arith.minsi %1, %c0_i32 : i32
    %c0_i32_0 = arith.constant 0 : i32
    %c0_i32_1 = arith.constant 0 : i32
    return %2, %c0_i32_0 : i32, i32
  }
  func.func @transform_1(%arg0: i32, %arg1: i32) -> (i32, i32) {
    %c1_i32 = arith.constant 1 : i32
    %0 = arith.muli %arg0, %c1_i32 : i32
    %1 = arith.addi %0, %arg1 : i32
    %c0_i32 = arith.constant 0 : i32
    %2 = arith.minsi %1, %c0_i32 : i32
    %c0_i32_0 = arith.constant 0 : i32
    %c0_i32_1 = arith.constant 0 : i32
    return %2, %c0_i32_0 : i32, i32
  }
  func.func @transform_2(%arg0: i32, %arg1: i32) -> (i32, i32, i32) {
    %c0_i32 = arith.constant 0 : i32
    %c0_i32_0 = arith.constant 0 : i32
    %c0_i32_1 = arith.constant 0 : i32
    return %arg0, %c0_i32, %c0_i32_0 : i32, i32, i32
  }
}

</mosaic_0001>

<llo_original>
// kernel: mape_loss.1
$region0: #{mape_loss.1}
  #allocation0 [shape = 'u32[]', space=smem, size = 0x4, offset = 0x4, fixed_abs, tag = 'smem constant byte address 0x4 - core index']
  #allocation1 [shape = 'u32[144,128]{1,0:T(1,128)}', space=vmem, size = 0x12000, scoped, tag = 'internal scratch']
  #allocation2 [shape = 'f32[8,128]{1,0:T(8,128)}', space=vmem, size = 0x1000, scoped, tag = 'scratch operand']
  %s0 = inlined_call_operand.vmem [shape: f32[16,128], index: 0, kind: input, shape index: {}]
  %s1 = inlined_call_operand.vmem [shape: f32[16,128], index: 1, kind: input, shape index: {}]
  %s2 = inlined_call_operand.vmem [shape: f32[1,8,128], index: 2, kind: output, shape index: {}]
  %s3 = sld [smem:[#allocation0]]
  $region26: #{mape_loss.1} parent=0
    _
  %s5 = ssub.s32 1, %s3
  %s6 = scalar_select 0, %s5, %s3
  // Predicated region
  $region2: #{mape_loss.1} parent=0 // pred_check
    _
  $region3: #{mape_loss.1} parent=0 // pred_check_branch
    %8 = sbr.rel (0) target = $region5
  $region4: #{mape_loss.1} parent=0 // pred_region
    %s9 = sadd.s32 0, 0
    %p10 = scmp.lt.s32.totalorder %s9, 0
    %s11 = scalar_select %p10, %s9, 0
    %s12 = smul.u32 2, %s11
    %p13 = scmp.lt.s32.totalorder %s12, 1
    %s14 = scalar_select %p13, %s12, 1
    %s15 = smul.addr %s14, 8
    %s16 = scalar_lea.vmem %s0, %s15
    %s17 = sadd.s32 0, 0
    %p18 = scmp.lt.s32.totalorder %s17, 0
    %s19 = scalar_select %p18, %s17, 0
    %s20 = smul.u32 2, %s19
  $region5: #{mape_loss.1} parent=0 // pred_fallthru
    _
  // Predicated region
  $region6: #{mape_loss.1} parent=0 // pred_check
    _
  $region7: #{mape_loss.1} parent=0 // pred_check_branch
    %22 = sbr.rel (0) target = $region9
  $region8: #{mape_loss.1} parent=0 // pred_region
    %s23 = sadd.s32 0, 0
    %p24 = scmp.lt.s32.totalorder %s23, 0
    %s25 = scalar_select %p24, %s23, 0
    %s26 = smul.u32 2, %s25
    %p27 = scmp.lt.s32.totalorder %s26, 1
    %s28 = scalar_select %p27, %s26, 1
    %s29 = smul.addr %s28, 8
    %s30 = scalar_lea.vmem %s1, %s29
    %s31 = sadd.s32 0, 0
    %p32 = scmp.lt.s32.totalorder %s31, 0
    %s33 = scalar_select %p32, %s31, 0
    %s34 = smul.u32 2, %s33
  $region9: #{mape_loss.1} parent=0 // pred_fallthru
    _
  %s35 = sadd.s32 0, 0
  %p36 = scmp.lt.s32.totalorder %s35, 0
  %s37 = scalar_select %p36, %s35, 0
  %s38 = smul.u32 2, %s37
  %p39 = scmp.lt.s32.totalorder %s38, 1
  %s40 = scalar_select %p39, %s38, 1
  %s41 = smul.addr %s40, 8
  %s42 = scalar_lea.vmem %s0, %s41
  %s43 = sadd.s32 0, 0
  %p44 = scmp.lt.s32.totalorder %s43, 0
  %s45 = scalar_select %p44, %s43, 0
  %s46 = smul.u32 2, %s45
  %p47 = scmp.lt.s32.totalorder %s46, 1
  %s48 = scalar_select %p47, %s46, 1
  %s49 = smul.addr %s48, 8
  %s50 = scalar_lea.vmem %s1, %s49
  %s51 = sadd.s32 0, 0
  %p52 = scmp.lt.s32.totalorder %s51, 0
  %s53 = scalar_select %p52, %s51, 0
  %s54 = smul.u32 2, %s53
  %p55 = scmp.lt.s32.totalorder %s54, 1
  %s56 = scalar_select %p55, %s54, 1
  %s57 = smul.addr %s56, 8
  %s58 = scalar_lea.vmem %s0, %s57
  %s59 = sadd.s32 0, 0
  %p60 = scmp.lt.s32.totalorder %s59, 0
  %s61 = scalar_select %p60, %s59, 0
  %s62 = smul.u32 2, %s61
  %s63 = sadd.s32 0, 0
  %p64 = scmp.lt.s32.totalorder %s63, 0
  %s65 = scalar_select %p64, %s63, 0
  %s66 = smul.u32 2, %s65
  %p67 = scmp.lt.s32.totalorder %s66, 1
  %s68 = scalar_select %p67, %s66, 1
  %s69 = smul.addr %s68, 8
  %s70 = scalar_lea.vmem %s1, %s69
  %s71 = sadd.s32 0, 0
  %p72 = scmp.lt.s32.totalorder %s71, 0
  %s73 = scalar_select %p72, %s71, 0
  %s74 = smul.u32 2, %s73
  %p75 = scmp.eq.s32.totalorder 0, 0
  // Predicated region
  $region10: #{mape_loss.1} parent=0 // pred_check
    %p76 = pneg %p75
  $region11: #{mape_loss.1} parent=0 // pred_check_branch
    %78 = sbr.rel (%p76) target = $region13
  $region12: #{mape_loss.1} parent=0 // pred_region
    %79 = vst [vmem:[#allocation2] sm:$0xff] 0.0
  $region13: #{mape_loss.1} parent=0 // pred_fallthru
    _
  %v80 = vld [vmem:[%s58] sm:$0xff]
  %v81 = vld [vmem:[%s58 + $0x8] sm:$0xff]
  %v82 = vld [vmem:[%s70] sm:$0xff]
  %v83 = vld [vmem:[%s70 + $0x8] sm:$0xff]
  %v84 = vsub.f32 %v80, %v82
  %v85 = vsub.f32 %v81, %v83
  %v86 = vand.u32 2147483647, %v84
  %v87 = vand.u32 2147483647, %v85
  %v88 = vand.u32 2147483647, %v82
  %v89 = vand.u32 2147483647, %v83
  %v90 = vmax.f32 %v88, 0.001
  %v91 = vmax.f32 %v89, 0.001
  %v92 = vrcp.pop %v90
  %v93 = vmul.f32 %v86, %v92
  %v94 = vrcp.pop %v91
  %v95 = vmul.f32 %v87, %v94
  %v96 = vld [vmem:[#allocation2] sm:$0xff]
  %v97 = vadd.f32 %v93, %v95
  %v98 = vadd.f32 %v96, %v97
  %99 = vst [vmem:[#allocation2] sm:$0xff] %v98
  // Predicated region
  $region14: #{mape_loss.1} parent=0 // pred_check
    %p100 = pneg %p75
  $region15: #{mape_loss.1} parent=0 // pred_check_branch
    %102 = sbr.rel (%p100) target = $region17
  $region16: #{mape_loss.1} parent=0 // pred_region
    %v103 = vld [vmem:[#allocation2] sm:$0xff]
    %104 = vst [vmem:[%s2] sm:$0xff] %v103
  $region17: #{mape_loss.1} parent=0 // pred_fallthru
    _
  // Predicated region
  $region18: #{mape_loss.1} parent=0 // pred_check
    _
  $region19: #{mape_loss.1} parent=0 // pred_check_branch
    %106 = sbr.rel (0) target = $region21
  $region20: #{mape_loss.1} parent=0 // pred_region
    _
  $region21: #{mape_loss.1} parent=0 // pred_fallthru
    _
  // Predicated region
  $region22: #{mape_loss.1} parent=0 // pred_check
    _
  $region23: #{mape_loss.1} parent=0 // pred_check_branch
    %108 = sbr.rel (0) target = $region25
  $region24: #{mape_loss.1} parent=0 // pred_region
    _
  $region25: #{mape_loss.1} parent=0 // pred_fallthru
    _

</llo_original>
